<compile_context>
chip_gen: v6e
topology: v6e:2x2x1
jax: 0.10.0
libtpu: 0.0.40
codegen_flags: <defaults>
</compile_context>

<pallas_src>
import math
import functools

import numpy as np
import jax
import jax.numpy as jnp
from jax.experimental import pallas as pl
from jax.experimental.pallas import tpu as pltpu


# ----------------------------------------------------------------------------
# Pallas kernel
# ----------------------------------------------------------------------------

def _posenc_kernel(x_ref, pe_ref, o_ref, *, xscale):
    # x_ref : (1, tile_t, D)   -- one batch row, one time tile
    # pe_ref: (tile_t, D)      -- shared PE tile (resident in VMEM across batch steps)
    # o_ref : (1, tile_t, D)
    o_ref[...] = x_ref[...] * xscale + pe_ref[...]


# ----------------------------------------------------------------------------
# PE table construction (matches torch extend_pe)
# ----------------------------------------------------------------------------

def make_pe(max_len, d_model, dtype=jnp.float32):
    position = np.arange(max_len, dtype=np.float32)[:, None]
    div_term = np.exp(
        np.arange(0, d_model, 2, dtype=np.float32) * -(math.log(10000.0) / d_model)
    )
    pe = np.zeros((max_len, d_model), np.float32)
    pe[:, 0::2] = np.sin(position * div_term)
    pe[:, 1::2] = np.cos(position * div_term)
    return jnp.asarray(pe, dtype=dtype)


# ----------------------------------------------------------------------------
# Forward wrapper
# ----------------------------------------------------------------------------

@functools.partial(jax.jit, static_argnames=("d_model", "tile_t"))
def positional_encoding_forward(x, pe_table, d_model, tile_t=512):
    """x: (B, T, D) -> x * sqrt(d_model) + pe[:T]  (dropout = identity in eval)."""
    B, T, D = x.shape
    assert D == d_model, "last dim of x must equal d_model"

    # Slice (not tile!) the PE table: (T, D).  It is broadcast over batch inside
    # the kernel via the BlockSpec index_map, never materialized B-times in HBM.
    pe = pe_table[:T].astype(x.dtype)

    # Time-tile size: full T if small, otherwise a sublane-aligned tile.
    tt = T if T <= tile_t else max(8, (tile_t // 8) * 8)

    grid = (pl.cdiv(T, tt), B)  # batch is the fast (inner) axis -> PE tile reused

    # NOTE: for best store throughput pick d_model as a multiple of 128 (lane-dense);
    # the kernel is still correct (masked stores) for smaller D.
    return pl.pallas_call(
        functools.partial(_posenc_kernel, xscale=math.sqrt(d_model)),
        grid=grid,
        in_specs=[
            pl.BlockSpec((1, tt, D), lambda t, b: (b, t, 0)),   # x
            pl.BlockSpec((tt, D), lambda t, b: (t, 0)),          # pe (b-invariant)
        ],
        out_specs=pl.BlockSpec((1, tt, D), lambda t, b: (b, t, 0)),
        out_shape=jax.ShapeDtypeStruct((B, T, D), x.dtype),
        compiler_params=pltpu.CompilerParams(
            dimension_semantics=("parallel", "parallel")
        ),
    )(x, pe)


# ----------------------------------------------------------------------------
# Main
# ----------------------------------------------------------------------------

if __name__ == "__main__":
    B = 2
    T = 64          # time steps
    D_MODEL = 128   # embedding dim (multiple of 128 -> lane-dense stores)
    MAX_LEN = 5000  # matches PyTorch default

    key = jax.random.PRNGKey(0)
    x = jax.random.normal(key, (B, T, D_MODEL), jnp.float32)

    pe_table = make_pe(MAX_LEN, D_MODEL)

    out = positional_encoding_forward(x, pe_table, D_MODEL)
    out = jax.block_until_ready(out)

    # Reference (pure JAX) check of forward semantics.
    ref = x * math.sqrt(D_MODEL) + pe_table[None, :T]
    np.testing.assert_allclose(np.asarray(out), np.asarray(ref), rtol=1e-6, atol=1e-6)
    assert np.all(np.isfinite(np.asarray(out)))

    print("KERNEL_OK")
</pallas_src>

<mosaic_0001>
module attributes {stable_mosaic.version = 11 : i64} {
  func.func @_posenc_kernel(%arg0: i32, %arg1: i32, %arg2: memref<1x64x128xf32, #tpu.memory_space<vmem>>, %arg3: memref<64x128xf32, #tpu.memory_space<vmem>>, %arg4: memref<1x64x128xf32, #tpu.memory_space<vmem>>) attributes {dimension_semantics = [#tpu.dimension_semantics<parallel>, #tpu.dimension_semantics<parallel>], iteration_bounds = array<i64: 1, 2>, scalar_prefetch = 0 : i64, scratch_operands = 0 : i64, tpu.core_type = #tpu.core_type<tc>, window_params = [{transform_indices = @transform_0, window_bounds = array<i64: 1, 64, 128>}, {transform_indices = @transform_1, window_bounds = array<i64: 64, 128>}, {transform_indices = @transform_2, window_bounds = array<i64: 1, 64, 128>}]} {
    %c0 = arith.constant 0 : index
    %c0_0 = arith.constant 0 : index
    %c0_1 = arith.constant 0 : index
    %0 = vector.load %arg2[%c0, %c0_0, %c0_1] : memref<1x64x128xf32, #tpu.memory_space<vmem>>, vector<1x64x128xf32>
    %cst = arith.constant 11.3137083 : f32
    %1 = vector.broadcast %cst : f32 to vector<1x64x128xf32>
    %2 = arith.mulf %0, %1 : vector<1x64x128xf32>
    %c0_2 = arith.constant 0 : index
    %c0_3 = arith.constant 0 : index
    %3 = vector.load %arg3[%c0_2, %c0_3] : memref<64x128xf32, #tpu.memory_space<vmem>>, vector<64x128xf32>
    %4 = vector.shape_cast %3 : vector<64x128xf32> to vector<1x64x128xf32>
    %5 = arith.addf %2, %4 : vector<1x64x128xf32>
    %c0_4 = arith.constant 0 : index
    %c0_5 = arith.constant 0 : index
    %c0_6 = arith.constant 0 : index
    %6 = vector.load %arg4[%c0_4, %c0_5, %c0_6] : memref<1x64x128xf32, #tpu.memory_space<vmem>>, vector<1x64x128xf32>
    tpu.vector_store %arg4[%c0_4, %c0_5, %c0_6], %5 {strides = array<i32>} : memref<1x64x128xf32, #tpu.memory_space<vmem>>, vector<1x64x128xf32>,
    return
  }
  func.func @transform_0(%arg0: i32, %arg1: i32) -> (i32, i32, i32) {
    %c0_i32 = arith.constant 0 : i32
    %c0_i32_0 = arith.constant 0 : i32
    return %arg1, %arg0, %c0_i32 : i32, i32, i32
  }
  func.func @transform_1(%arg0: i32, %arg1: i32) -> (i32, i32) {
    %c0_i32 = arith.constant 0 : i32
    %c0_i32_0 = arith.constant 0 : i32
    return %arg0, %c0_i32 : i32, i32
  }
  func.func @transform_2(%arg0: i32, %arg1: i32) -> (i32, i32, i32) {
    %c0_i32 = arith.constant 0 : i32
    %c0_i32_0 = arith.constant 0 : i32
    return %arg1, %arg0, %c0_i32 : i32, i32, i32
  }
}

</mosaic_0001>

<llo_original>
// kernel: positional_encoding_forward.1
$region0: #{positional_encoding_forward.1}
  #allocation0 [shape = 'u32[]', space=smem, size = 0x4, offset = 0x4, fixed_abs, tag = 'smem constant byte address 0x4 - core index']
  #allocation1 [shape = 'u32[144,128]{1,0:T(1,128)}', space=vmem, size = 0x12000, scoped, tag = 'internal scratch']
  %s0 = inlined_call_operand.hbm [shape: f32[2,64,128], index: 0, kind: input, shape index: {}]
  %s1 = inlined_call_operand.vmem [shape: f32[64,128], index: 1, kind: input, shape index: {}]
  %s2 = inlined_call_operand.hbm [shape: f32[2,64,128], index: 2, kind: output, shape index: {}]
  %s3 = sld [smem:[#allocation0]]
  $region45: #{positional_encoding_forward.1} parent=0
    _
  %s5 = ssub.s32 1, %s3
  %s6 = scalar_select 0, %s5, %s3
  $region1: #{positional_encoding_forward.1} parent=0
    #allocation2 [shape = 'u8[65536]{0}', space=vmem, size = 0x10000, scoped, tag = 'input window, operand 0']
    #allocation3 [shape = 's32[2]{0}', space=sflag, size = 0x8, scoped, tag = 'scoped memory for positional_encoding_forward.1']
    #allocation4 [shape = 's32[2]{0}', space=sflag, size = 0x8, scoped, tag = 'scoped memory for positional_encoding_forward.1']
    #allocation5 [shape = 'u8[65536]{0}', space=vmem, size = 0x10000, scoped, tag = 'output window, operand 0']
    %7 = vsyncpa [#allocation3], 0
    %s8 = scalar_lea.sflag [#allocation3], 1
    %9 = vsyncpa %s8, 0
    %10 = vsyncpa [#allocation4], 0
    %s11 = scalar_lea.sflag [#allocation4], 1
    %12 = vsyncpa %s11, 0
    loop: start=0, step=1, limit=4
    $region2: #{positional_encoding_forward.1} parent=1 // loop_pre_header
      _
    $region3: #{positional_encoding_forward.1} parent=1 // loop_header
      %s14 = sphi 0, %s18
      %p15 = scmp.ge.s32.totalorder %s14, 4
      %s21 = sphi 0, %s33
      %s22 = sphi 0, %s29
      %s23 = sphi 0, %s21
      %s24 = sphi 0, %s22
      %s25 = sphi 0, %s23
      %s26 = sphi 0, %s24
      %s38 = sphi 0, %s40
      %s41 = sphi 0, %s38
      %s42 = sphi 0, %s41
      %s58 = sphi 0, %s42
      %s64 = sphi 0, %s66
      %s67 = sphi 0, %s64
      %s68 = sphi 0, %s67
      %s84 = sphi 0, %s68
      %s92 = sphi 0, %s94
      %s95 = sphi 0, %s92
      %s96 = sphi 0, %s95
      %s112 = sphi 0, %s96
    $region4: #{positional_encoding_forward.1} parent=1 // loop_header_branch
      %17 = sbr.rel (%p15) target = $region8
    $region5: #{positional_encoding_forward.1} parent=1 // loop_body
      %s19 = ssub.s32 %s14, 1
      %s20 = ssub.s32 %s14, 2
      %s27 = sadd.s32 1, %s22
      %p28 = scmp.ge.s32.totalorder %s27, 2
      %s29 = scalar_select %p28, 0, %s27
      %s30 = sadd.s32 1, %s21
      %s31 = scalar_select %p28, %s30, %s21
      %p32 = scmp.ge.s32.totalorder %s31, 1
      %s33 = scalar_select %p32, 0, %s31
      %s34 = ssub.s32 %s22, %s29
      %s35 = ssub.s32 %s21, %s33
      %s36 = sor.u32 %s34, %s35
      %p37 = scmp.eq.s32.totalorder %s36, 0
      %s39 = sadd.s32 %s38, 1
      %s40 = scalar_select %p37, %s38, %s39
      %p43 = pneg %p37
      %p44 = scmp.eq.s32.totalorder %s14, 1
      %p45 = por %p43, %p44
      %p46 = scmp.ne.s32.totalorder %s38, %s41
      %p47 = scmp.eq.s32.totalorder %s14, 0
      %p48 = por %p46, %p47
      %p49 = scmp.ne.s32.totalorder %s38, %s41
      %p50 = scmp.eq.s32.totalorder %s19, 1
      %p51 = por %p49, %p50
      %p52 = scmp.ne.s32.totalorder %s41, %s42
      %p53 = scmp.eq.s32.totalorder %s19, 0
      %p54 = por %p52, %p53
      %p55 = scmp.ne.s32.totalorder %s41, %s42
      %p56 = scmp.eq.s32.totalorder %s20, 1
      %p57 = por %p55, %p56
      %p59 = scmp.ne.s32.totalorder %s42, %s58
      %p60 = scmp.eq.s32.totalorder %s20, 0
      %p61 = por %p59, %p60
      %s62 = ssub.s32 %s21, %s33
      %p63 = scmp.eq.s32.totalorder %s62, 0
      %s65 = sadd.s32 %s64, 1
      %s66 = scalar_select %p63, %s64, %s65
      %p69 = pneg %p63
      %p70 = scmp.eq.s32.totalorder %s14, 1
      %p71 = por %p69, %p70
      %p72 = scmp.ne.s32.totalorder %s64, %s67
      %p73 = scmp.eq.s32.totalorder %s14, 0
      %p74 = por %p72, %p73
      %p75 = scmp.ne.s32.totalorder %s64, %s67
      %p76 = scmp.eq.s32.totalorder %s19, 1
      %p77 = por %p75, %p76
      %p78 = scmp.ne.s32.totalorder %s67, %s68
      %p79 = scmp.eq.s32.totalorder %s19, 0
      %p80 = por %p78, %p79
      %p81 = scmp.ne.s32.totalorder %s67, %s68
      %p82 = scmp.eq.s32.totalorder %s20, 1
      %p83 = por %p81, %p82
      %p85 = scmp.ne.s32.totalorder %s68, %s84
      %p86 = scmp.eq.s32.totalorder %s20, 0
      %p87 = por %p85, %p86
      %s88 = ssub.s32 %s22, %s29
      %s89 = ssub.s32 %s21, %s33
      %s90 = sor.u32 %s88, %s89
      %p91 = scmp.eq.s32.totalorder %s90, 0
      %s93 = sadd.s32 %s92, 1
      %s94 = scalar_select %p91, %s92, %s93
      %p97 = pneg %p91
      %p98 = scmp.eq.s32.totalorder %s14, 1
      %p99 = por %p97, %p98
      %p100 = scmp.ne.s32.totalorder %s92, %s95
      %p101 = scmp.eq.s32.totalorder %s14, 0
      %p102 = por %p100, %p101
      %p103 = scmp.ne.s32.totalorder %s92, %s95
      %p104 = scmp.eq.s32.totalorder %s19, 1
      %p105 = por %p103, %p104
      %p106 = scmp.ne.s32.totalorder %s95, %s96
      %p107 = scmp.eq.s32.totalorder %s19, 0
      %p108 = por %p106, %p107
      %p109 = scmp.ne.s32.totalorder %s95, %s96
      %p110 = scmp.eq.s32.totalorder %s20, 1
      %p111 = por %p109, %p110
      %p113 = scmp.ne.s32.totalorder %s96, %s112
      %p114 = scmp.eq.s32.totalorder %s20, 0
      %p115 = por %p113, %p114
      %p116 = scmp.le.s32.totalorder 1, %s14
      %p117 = scmp.lt.s32.totalorder %s14, 3
      %p118 = pnand %p116, %p117
      %p119 = pneg %p118
      // Predicated region
      $region9: #{positional_encoding_forward.1} parent=5 // pred_check
        _
      $region10: #{positional_encoding_forward.1} parent=5 // pred_check_branch
        %121 = sbr.rel (%p118) target = $region12
      $region11: #{positional_encoding_forward.1} parent=5 // pred_region
        %s122 = ssub.s32 %s14, 1
        // Predicated region
        $region13: #{positional_encoding_forward.1} parent=11 // pred_check
          %p123 = pneg %p80
        $region14: #{positional_encoding_forward.1} parent=11 // pred_check_branch
          %125 = sbr.rel (%p123) target = $region16
        $region15: #{positional_encoding_forward.1} parent=11 // pred_region
          %s126 = smul.u32 8, %s23
          %p127 = scmp.lt.s32.totalorder %s126, 7
          %s128 = scalar_select %p127, %s126, 7
          %s129 = smul.addr %s128, 8
          %s130 = scalar_lea.vmem %s1, %s129
          %s131 = smul.u32 8, %s23
        $region16: #{positional_encoding_forward.1} parent=11 // pred_fallthru
          _
      $region12: #{positional_encoding_forward.1} parent=5 // pred_fallthru
        _
      %p132 = scmp.lt.s32.totalorder %s14, 2
      // Predicated region
      $region17: #{positional_encoding_forward.1} parent=5 // pred_check
        %p133 = pneg %p132
      $region18: #{positional_encoding_forward.1} parent=5 // pred_check_branch
        %135 = sbr.rel (%p133) target = $region20
      $region19: #{positional_encoding_forward.1} parent=5 // pred_region
        // Predicated region
        $region21: #{positional_encoding_forward.1} parent=19 // pred_check
          %p136 = pneg %p48
        $region22: #{positional_encoding_forward.1} parent=19 // pred_check_branch
          %138 = sbr.rel (%p136) target = $region24
        $region23: #{positional_encoding_forward.1} parent=19 // pred_region
          %s139 = sand.u32 %s38, 1
          %s140 = scalar_lea.sflag [#allocation3], %s139
          %s141 = sand.u32 %s38, 1
          %s142 = smul.addr %s141, 64
          %s143 = scalar_lea.vmem [#allocation2], %s142
          %s144 = smul.u32 8, %s21
          %s146 = ssub.s32 1024, 1024
          %147 = vsyncadd %s140, %s146
          %s148 = smul.addr %s22, 8
          %s149 = sadd.s32 %s144, %s148
          %s150 = smul.addr %s149, 128
          %s151 = scalar_lea.hbm %s0, %s150
          %s152 = sshll.u32 %s143, 4
          %s153 = int_to_ptr.vmem [resolvable:$true] %s152
          %158 = dma.hbm_to_vmem [thread:$0]  %s151, 1024, %s153, %s140, 128, 128, 8
        $region24: #{positional_encoding_forward.1} parent=19 // pred_fallthru
          _
      $region20: #{positional_encoding_forward.1} parent=5 // pred_fallthru
        _
      %p159 = scmp.le.s32.totalorder 1, %s14
      %p160 = scmp.lt.s32.totalorder %s14, 3
      %p161 = pnand %p159, %p160
      %p162 = pneg %p161
      // Predicated region
      $region25: #{positional_encoding_forward.1} parent=5 // pred_check
        _
      $region26: #{positional_encoding_forward.1} parent=5 // pred_check_branch
        %164 = sbr.rel (%p161) target = $region28
      $region27: #{positional_encoding_forward.1} parent=5 // pred_region
        %s165 = ssub.s32 %s14, 1
        %s166 = sand.u32 %s41, 1
        %s167 = scalar_lea.sflag [#allocation3], %s166
        %s168 = sand.u32 %s41, 1
        %s169 = smul.addr %s168, 64
        %s170 = scalar_lea.vmem [#allocation2], %s169
        // Predicated region
        $region29: #{positional_encoding_forward.1} parent=27 // pred_check
          %p171 = pneg %p54
        $region30: #{positional_encoding_forward.1} parent=27 // pred_check_branch
          %173 = sbr.rel (%p171) target = $region32
        $region31: #{positional_encoding_forward.1} parent=27 // pred_region
          %174 = dma.done %s167, 1024
        $region32: #{positional_encoding_forward.1} parent=27 // pred_fallthru
          _
        %s175 = sand.u32 %s41, 1
        %s176 = scalar_lea.sflag [#allocation3], %s175
        %s177 = sand.u32 %s41, 1
        %s178 = smul.addr %s177, 64
        %s179 = scalar_lea.vmem [#allocation2], %s178
        %p180 = pneg %p54
        %p181 = pneg %p51
        %s182 = smul.u32 8, %s23
        %p183 = scmp.lt.s32.totalorder %s182, 7
        %s184 = scalar_select %p183, %s182, 7
        %s185 = smul.addr %s184, 8
        %s186 = scalar_lea.vmem %s1, %s185
        %p187 = pneg %p80
        %p188 = pneg %p77
        %p189 = pneg %p108
        %p190 = pneg %p105
        %s191 = sand.u32 %s95, 1
        %s192 = scalar_lea.sflag [#allocation4], %s191
        %s193 = sand.u32 %s95, 1
        %s194 = smul.addr %s193, 64
        %s195 = scalar_lea.vmem [#allocation5], %s194
        %s196 = smul.u32 8, %s23
        %s197 = smul.u32 8, %s23
        %p198 = scmp.lt.s32.totalorder %s197, 7
        %s199 = scalar_select %p198, %s197, 7
        %s200 = smul.addr %s199, 8
        %s201 = scalar_lea.vmem %s1, %s200
        %s202 = smul.u32 8, %s23
        %s203 = smul.u32 8, %s23
        %v204 = vld [vmem:[%s170] sm:$0xff]
        %v205 = vld [vmem:[%s170 + $0x8] sm:$0xff]
        %v206 = vld [vmem:[%s170 + $0x10] sm:$0xff]
        %v207 = vld [vmem:[%s170 + $0x18] sm:$0xff]
        %v208 = vld [vmem:[%s170 + $0x20] sm:$0xff]
        %v209 = vld [vmem:[%s170 + $0x28] sm:$0xff]
        %v210 = vld [vmem:[%s170 + $0x30] sm:$0xff]
        %v211 = vld [vmem:[%s170 + $0x38] sm:$0xff]
        %v212 = vmul.f32 %v204, 11.313708
        %v213 = vmul.f32 %v205, 11.313708
        %v214 = vmul.f32 %v206, 11.313708
        %v215 = vmul.f32 %v207, 11.313708
        %v216 = vmul.f32 %v208, 11.313708
        %v217 = vmul.f32 %v209, 11.313708
        %v218 = vmul.f32 %v210, 11.313708
        %v219 = vmul.f32 %v211, 11.313708
        %v220 = vld [vmem:[%s201] sm:$0xff]
        %v221 = vld [vmem:[%s201 + $0x8] sm:$0xff]
        %v222 = vld [vmem:[%s201 + $0x10] sm:$0xff]
        %v223 = vld [vmem:[%s201 + $0x18] sm:$0xff]
        %v224 = vld [vmem:[%s201 + $0x20] sm:$0xff]
        %v225 = vld [vmem:[%s201 + $0x28] sm:$0xff]
        %v226 = vld [vmem:[%s201 + $0x30] sm:$0xff]
        %v227 = vld [vmem:[%s201 + $0x38] sm:$0xff]
        %v228 = vadd.f32 %v212, %v220
        %v229 = vadd.f32 %v213, %v221
        %v230 = vadd.f32 %v214, %v222
        %v231 = vadd.f32 %v215, %v223
        %v232 = vadd.f32 %v216, %v224
        %v233 = vadd.f32 %v217, %v225
        %v234 = vadd.f32 %v218, %v226
        %v235 = vadd.f32 %v219, %v227
        %236 = vst [vmem:[%s195] sm:$0xff] %v228
        %237 = vst [vmem:[%s195 + $0x8] sm:$0xff] %v229
        %238 = vst [vmem:[%s195 + $0x10] sm:$0xff] %v230
        %239 = vst [vmem:[%s195 + $0x18] sm:$0xff] %v231
        %240 = vst [vmem:[%s195 + $0x20] sm:$0xff] %v232
        %241 = vst [vmem:[%s195 + $0x28] sm:$0xff] %v233
        %242 = vst [vmem:[%s195 + $0x30] sm:$0xff] %v234
        %243 = vst [vmem:[%s195 + $0x38] sm:$0xff] %v235
        %s244 = sand.u32 %s95, 1
        %s245 = scalar_lea.sflag [#allocation4], %s244
        %s246 = sand.u32 %s95, 1
        %s247 = smul.addr %s246, 64
        %s248 = scalar_lea.vmem [#allocation5], %s247
        // Predicated region
        $region33: #{positional_encoding_forward.1} parent=27 // pred_check
          %p249 = pneg %p105
        $region34: #{positional_encoding_forward.1} parent=27 // pred_check_branch
          %251 = sbr.rel (%p249) target = $region36
        $region35: #{positional_encoding_forward.1} parent=27 // pred_region
          %s252 = smul.u32 8, %s23
          %s254 = ssub.s32 1024, 1024
          %255 = vsyncadd %s245, %s254
          %s256 = smul.addr %s24, 8
          %s257 = sadd.s32 %s252, %s256
          %s258 = smul.addr %s257, 128
          %s259 = scalar_lea.hbm %s2, %s258
          %s260 = sshll.u32 %s248, 4
          %s261 = int_to_ptr.vmem [resolvable:$true] %s260
          %266 = dma.vmem_to_hbm [thread:$0]  %s261, 1024, %s259, %s245, 128, 128, 8
        $region36: #{positional_encoding_forward.1} parent=27 // pred_fallthru
          _
      $region28: #{positional_encoding_forward.1} parent=5 // pred_fallthru
        _
      %p267 = scmp.le.s32.totalorder 2, %s14
      // Predicated region
      $region37: #{positional_encoding_forward.1} parent=5 // pred_check
        %p268 = pneg %p267
      $region38: #{positional_encoding_forward.1} parent=5 // pred_check_branch
        %270 = sbr.rel (%p268) target = $region40
      $region39: #{positional_encoding_forward.1} parent=5 // pred_region
        %s271 = ssub.s32 %s14, 2
        // Predicated region
        $region41: #{positional_encoding_forward.1} parent=39 // pred_check
          %p272 = pneg %p111
        $region42: #{positional_encoding_forward.1} parent=39 // pred_check_branch
          %274 = sbr.rel (%p272) target = $region44
        $region43: #{positional_encoding_forward.1} parent=39 // pred_region
          %s275 = sand.u32 %s96, 1
          %s276 = scalar_lea.sflag [#allocation4], %s275
          %s277 = sand.u32 %s96, 1
          %s278 = smul.addr %s277, 64
          %s279 = scalar_lea.vmem [#allocation5], %s278
          %280 = dma.done %s276, 1024
        $region44: #{positional_encoding_forward.1} parent=39 // pred_fallthru
          _
      $region40: #{positional_encoding_forward.1} parent=5 // pred_fallthru
        _
    $region6: #{positional_encoding_forward.1} parent=1 // loop_footer
      %s18 = sadd.s32 1, %s14
    $region7: #{positional_encoding_forward.1} parent=1 // loop_footer_branch
      %13 = sbr.rel target = $region3
    $region8: #{positional_encoding_forward.1} parent=1 // loop_exit
      _
    %281 = vsyncpa [#allocation3], 1
    %s282 = scalar_lea.sflag [#allocation3], 1
    %283 = vsyncpa %s282, 1
    %284 = vsyncpa [#allocation4], 1
    %s285 = scalar_lea.sflag [#allocation4], 1
    %286 = vsyncpa %s285, 1

</llo_original>
